<compile_context>
chip_gen: v5e
topology: v5e:2x2
jax: 0.10.0
libtpu: 0.0.40
codegen_flags: <defaults>
</compile_context>

<pallas_src>
import jax
import jax.numpy as jnp
import numpy as np
from jax import lax
from jax.experimental import pallas as pl
from jax.experimental.pallas import tpu as pltpu

EPS = 1e-5


# ---------------------------------------------------------------------------
# Tiling heuristics.
# ---------------------------------------------------------------------------
def _pick_point_tile(n, max_tile):
    """Point tile: whole axis if small, else a multiple of 128 (divisor if any)."""
    if n <= max_tile:
        return n
    cap = max(128, (max_tile // 128) * 128)
    for tn in range(cap, 127, -128):
        if n % tn == 0:
            return tn
    return cap  # no nice divisor: ragged last tile, masked with -inf in-kernel


def _pick_batch_block(b, per_batch_bytes, max_bb, budget_bytes):
    """Largest divisor of b (<= max_bb) whose per-step VMEM fits the budget."""
    cap = max(1, min(max_bb, budget_bytes // max(per_batch_bytes, 1)))
    for bb in range(min(b, cap), 0, -1):
        if b % bb == 0:
            return bb
    return 1


# ---------------------------------------------------------------------------
# Fused kernel: point MLP -> max pool -> MLP head -> per-cloud transform.
#   grid = (B // BB, num_point_tiles); batch blocks 'parallel', points
#   'arbitrary'.  acc_ref is a lane-wide running max; xbuf_ref keeps the cloud
#   resident in VMEM so the transform never re-reads x from HBM.
# ---------------------------------------------------------------------------
def _make_tnet_kernel(*, c_in, t_size, n, tn, num_tiles, bb):
    need_mask = (n % tn) != 0
    use_xbuf = num_tiles > 1

    def kernel(x_ref, w1_ref, b1_ref, w2_ref, b2_ref,
               mw1_ref, mb1_ref, mw2_ref, mb2_ref,
               t_ref, xt_ref, acc_ref, *xbuf):
        xbuf_ref = xbuf[0] if use_xbuf else None
        nj = pl.program_id(1)

        @pl.when(nj == 0)
        def _init():
            # -inf keeps the running max correct regardless of activation sign.
            acc_ref[...] = jnp.full(acc_ref.shape, -jnp.inf, acc_ref.dtype)

        w1 = w1_ref[...]          # (C1, c_in), BN folded
        b1 = b1_ref[...]
        w2 = w2_ref[...]          # (C2, C1), BN folded
        b2 = b2_ref[...]

        if need_mask:
            col = lax.broadcasted_iota(jnp.int32, (1, tn), 1) + nj * tn
            lane_valid = col < n

        for bi in range(bb):                       # static unroll over batch block
            x = x_ref[bi]                          # (c_in, tn)
            if use_xbuf:
                start = nj * tn
                if tn % 128 == 0:
                    start = pl.multiple_of(start, 128)
                xbuf_ref[bi * c_in:(bi + 1) * c_in, pl.ds(start, tn)] = x

            # First 1x1 conv: K = c_in is tiny (3..6) -> VPU broadcast-FMAs
            # (an MXU matmul would waste >95% of the systolic array).
            if c_in <= 8:
                h = w1[:, 0:1] * x[0:1, :]
                for c in range(1, c_in):
                    h = h + w1[:, c:c + 1] * x[c:c + 1, :]
            else:
                h = jnp.dot(w1, x, preferred_element_type=jnp.float32)
            h = jnp.maximum(h + b1, 0.0)           # (C1, tn)

            # Second 1x1 conv: real contraction -> MXU.
            g = jnp.dot(w2, h, preferred_element_type=jnp.float32) + b2
            g = jnp.maximum(g, 0.0)                # (C2, tn)

            if need_mask:
                g = jnp.where(lane_valid, g, -jnp.inf)   # ragged last tile
            # Lane-wide running max: VPU only; cross-lane reduce deferred.
            acc_ref[bi] = jnp.maximum(acc_ref[bi], g)

        @pl.when(nj == pl.num_programs(1) - 1)
        def _finalize():
            mw1 = mw1_ref[...]
            mb1 = mb1_ref[...]
            mw2 = mw2_ref[...]
            mb2 = mb2_ref[...]
            for bi in range(bb):
                # Single XLU cross-lane reduce per cloud.
                gf = jnp.max(acc_ref[bi], axis=-1, keepdims=True)           # (C2, 1)
                h2 = jnp.dot(mw1, gf, preferred_element_type=jnp.float32) + mb1
                h2 = jnp.maximum(h2, 0.0)                                   # (H, 1)
                t_col = jnp.dot(mw2, h2, preferred_element_type=jnp.float32) + mb2
                t_ref[bi] = t_col                                           # (t*t, 1)

                # Apply t to the first t_size channels, pass the rest through.
                if use_xbuf:
                    xsrc = xbuf_ref[bi * c_in:(bi + 1) * c_in, :]           # (c_in, n_pad)
                else:
                    xsrc = x_ref[bi]                                        # (c_in, n)
                rows = []
                for i in range(t_size):
                    r = t_col[i * t_size:i * t_size + 1, 0:1] * xsrc[0:1, :]
                    for j in range(1, t_size):
                        r = r + (t_col[i * t_size + j:i * t_size + j + 1, 0:1]
                                 * xsrc[j:j + 1, :])
                    rows.append(r)
                if c_in > t_size:
                    rows.append(xsrc[t_size:, :])
                out = jnp.concatenate(rows, axis=0)                         # (c_in, width)
                xt_ref[bi] = out[:, :n]

    return kernel


# ---------------------------------------------------------------------------
# Forward pass wrapper: one pallas_call producing (t, x_t).
# ---------------------------------------------------------------------------
def tnet_forward(x, params, t_size, *, max_point_tile=4096, max_batch_block=8):
    x = x.astype(jnp.float32)
    B, C_in, N = x.shape
    pm, m = params['point_mlp'], params['mlp']
    C2 = pm['w2'].shape[0]
    TT = m['w2'].shape[0]
    assert TT == t_size * t_size and C_in >= t_size

    TN = _pick_point_tile(N, max_point_tile)
    num_tiles = pl.cdiv(N, TN)
    n_pad = num_tiles * TN
    use_xbuf = num_tiles > 1

    # Per-cloud f32 VMEM footprint: lane-wide max acc + double-buffered x tile
    # + resident x_t output block (+ x-resident copy when the points axis tiles).
    per_batch = 4 * (C2 * TN + 2 * C_in * TN + C_in * N
                     + (C_in * n_pad if use_xbuf else 0))
    BB = _pick_batch_block(B, per_batch, max_batch_block, budget_bytes=6 << 20)
    # TODO(synk): on v7x with tiny B, additionally split the points axis across
    # the two TensorCores (core_parallel + cross-core max merge).

    kernel = _make_tnet_kernel(c_in=C_in, t_size=t_size, n=N, tn=TN,
                               num_tiles=num_tiles, bb=BB)

    def wspec(a):
        return pl.BlockSpec(a.shape, lambda bb_, nj_: (0, 0))

    scratch = [pltpu.VMEM((BB, C2, TN), jnp.float32)]
    if use_xbuf:
        scratch.append(pltpu.VMEM((BB * C_in, n_pad), jnp.float32))

    grid_spec = pltpu.PrefetchScalarGridSpec(
        num_scalar_prefetch=0,
        grid=(B // BB, num_tiles),
        in_specs=[
            pl.BlockSpec((BB, C_in, TN), lambda bb_, nj_: (bb_, 0, nj_)),
            wspec(pm['w1']), wspec(pm['b1']),
            wspec(pm['w2']), wspec(pm['b2']),
            wspec(m['w1']), wspec(m['b1']),
            wspec(m['w2']), wspec(m['b2']),
        ],
        out_specs=[
            pl.BlockSpec((BB, TT, 1), lambda bb_, nj_: (bb_, 0, 0)),
            pl.BlockSpec((BB, C_in, N), lambda bb_, nj_: (bb_, 0, 0)),
        ],
        scratch_shapes=scratch,
    )

    t_col, x_t = pl.pallas_call(
        kernel,
        out_shape=(jax.ShapeDtypeStruct((B, TT, 1), jnp.float32),
                   jax.ShapeDtypeStruct((B, C_in, N), jnp.float32)),
        grid_spec=grid_spec,
        compiler_params=pltpu.CompilerParams(
            dimension_semantics=("parallel", "arbitrary"),
            vmem_limit_bytes=64 * 1024 * 1024),
    )(x, pm['w1'], pm['b1'], pm['w2'], pm['b2'],
      m['w1'], m['b1'], m['w2'], m['b2'])

    t = t_col.reshape(B, t_size, t_size)
    return t, x_t


# ---------------------------------------------------------------------------
# Deterministic parameter init with eval-mode BatchNorm folded into the
# preceding conv/linear weights:  BN(W x + b) == W' x + b'.
# ---------------------------------------------------------------------------
def _fold_bn(w, b, gamma, beta, mean, var):
    s = gamma / jnp.sqrt(var + EPS)
    w_f = w * s[:, None]
    b_f = (b - mean[:, None]) * s[:, None] + beta[:, None]
    return w_f.astype(jnp.float32), b_f.astype(jnp.float32)


def init_params(key, in_features, t_size, pm_dims=(32, 64), mlp_hidden=32):
    C1, C2 = pm_dims
    H = mlp_hidden
    ks = jax.random.split(key, 9)

    def bn(k, c):
        kg, kb, km = jax.random.split(k, 3)
        gamma = 1.0 + 0.1 * jax.random.normal(kg, (c,), jnp.float32)
        beta = 0.1 * jax.random.normal(kb, (c,), jnp.float32)
        mean = 0.1 * jax.random.normal(km, (c,), jnp.float32)
        var = jnp.ones((c,), jnp.float32)
        return gamma, beta, mean, var

    w1 = 0.1 * jax.random.normal(ks[0], (C1, in_features), jnp.float32)
    b1 = 0.1 * jax.random.normal(ks[1], (C1, 1), jnp.float32)
    w1, b1 = _fold_bn(w1, b1, *bn(ks[2], C1))

    w2 = 0.1 * jax.random.normal(ks[3], (C2, C1), jnp.float32)
    b2 = 0.1 * jax.random.normal(ks[4], (C2, 1), jnp.float32)
    w2, b2 = _fold_bn(w2, b2, *bn(ks[5], C2))

    mw1 = 0.1 * jax.random.normal(ks[6], (H, C2), jnp.float32)
    mb1 = 0.1 * jax.random.normal(ks[7], (H, 1), jnp.float32)
    mw1, mb1 = _fold_bn(mw1, mb1, *bn(ks[8], H))

    # Last MLP layer per _TNetBase.__init__: weight = 0, bias = eye(t_size).
    mw2 = jnp.zeros((t_size * t_size, H), jnp.float32)
    mb2 = jnp.eye(t_size, dtype=jnp.float32).reshape(t_size * t_size, 1)

    return dict(point_mlp=dict(w1=w1, b1=b1, w2=w2, b2=b2),
                mlp=dict(w1=mw1, b1=mb1, w2=mw2, b2=mb2))


# ---------------------------------------------------------------------------
# Pure-JAX reference (numerical sanity check, uses the same folded params).
# ---------------------------------------------------------------------------
def tnet_ref(x, params, t_size):
    hp = lax.Precision.HIGHEST
    pm, m = params['point_mlp'], params['mlp']
    h = jnp.maximum(jnp.einsum('oc,bcn->bon', pm['w1'], x, precision=hp)
                    + pm['b1'][None], 0.0)
    g = jnp.maximum(jnp.einsum('oc,bcn->bon', pm['w2'], h, precision=hp)
                    + pm['b2'][None], 0.0)
    gf = jnp.max(g, axis=-1)                                          # (B, C2)
    h2 = jnp.maximum(jnp.einsum('bc,hc->bh', gf, m['w1'], precision=hp)
                     + m['b1'][:, 0][None], 0.0)
    tf = jnp.einsum('bh,th->bt', h2, m['w2'], precision=hp) + m['b2'][:, 0][None]
    t = tf.reshape(x.shape[0], t_size, t_size)
    xt3 = jnp.einsum('bij,bjn->bin', t, x[:, :t_size], precision=hp)
    if x.shape[1] > t_size:
        return t, jnp.concatenate([xt3, x[:, t_size:]], axis=1)
    return t, xt3


if __name__ == "__main__":
    key = jax.random.PRNGKey(0)
    fwd = jax.jit(tnet_forward, static_argnums=(2,),
                  static_argnames=("max_point_tile", "max_batch_block"))

    # Case 1: in_features > t_size; non-trivial last layer so the bmm path is
    # genuinely exercised (module init makes t == I otherwise).
    B, C, N, ts = 2, 4, 16, 3
    k1, k2, k3, key = jax.random.split(key, 4)
    x = jax.random.normal(k1, (B, C, N), jnp.float32)
    params = init_params(k2, C, ts)
    params['mlp']['w2'] = 0.05 * jax.random.normal(k3, params['mlp']['w2'].shape,
                                                   jnp.float32)
    t, x_t = fwd(x, params, ts)
    jax.block_until_ready((t, x_t))
    t_r, x_t_r = tnet_ref(x, params, ts)
    assert t.shape == (B, ts, ts) and x_t.shape == x.shape
    np.testing.assert_allclose(np.asarray(t), np.asarray(t_r), rtol=1e-3, atol=1e-4)
    np.testing.assert_allclose(np.asarray(x_t), np.asarray(x_t_r), rtol=1e-3, atol=1e-4)

    # Case 2: in_features == t_size, module-default last layer (t == identity).
    B2, t2, N2 = 2, 3, 16
    k4, k5, key = jax.random.split(key, 3)
    x2 = jax.random.normal(k4, (B2, t2, N2), jnp.float32)
    params2 = init_params(k5, t2, t2)
    tt2, xt2 = fwd(x2, params2, t2)
    jax.block_until_ready((tt2, xt2))
    tt2_r, xt2_r = tnet_ref(x2, params2, t2)
    np.testing.assert_allclose(np.asarray(tt2), np.asarray(tt2_r), rtol=1e-3, atol=1e-4)
    np.testing.assert_allclose(np.asarray(xt2), np.asarray(xt2_r), rtol=1e-3, atol=1e-4)

    # Case 3: multi-tile points axis with a ragged last tile (exercises the
    # -inf lane mask, the x-resident VMEM buffer and batch blocking BB=3).
    B3, C3, N3, ts3 = 3, 5, 300, 3
    k6, k7, k8 = jax.random.split(key, 3)
    x3 = jax.random.normal(k6, (B3, C3, N3), jnp.float32)
    params3 = init_params(k7, C3, ts3)
    params3['mlp']['w2'] = 0.05 * jax.random.normal(k8, params3['mlp']['w2'].shape,
                                                    jnp.float32)
    t3, xt3 = fwd(x3, params3, ts3, max_point_tile=128)
    jax.block_until_ready((t3, xt3))
    t3_r, xt3_r = tnet_ref(x3, params3, ts3)
    np.testing.assert_allclose(np.asarray(t3), np.asarray(t3_r), rtol=1e-3, atol=1e-4)
    np.testing.assert_allclose(np.asarray(xt3), np.asarray(xt3_r), rtol=1e-3, atol=1e-4)

    print("KERNEL_OK")
</pallas_src>

<mosaic_0001>
module attributes {stable_mosaic.version = 11 : i64} {
  func.func @kernel(%arg0: i32, %arg1: i32, %arg2: memref<2x4x16xf32, #tpu.memory_space<vmem>>, %arg3: memref<32x4xf32, #tpu.memory_space<vmem>>, %arg4: memref<32x1xf32, #tpu.memory_space<vmem>>, %arg5: memref<64x32xf32, #tpu.memory_space<vmem>>, %arg6: memref<64x1xf32, #tpu.memory_space<vmem>>, %arg7: memref<32x64xf32, #tpu.memory_space<vmem>>, %arg8: memref<32x1xf32, #tpu.memory_space<vmem>>, %arg9: memref<9x32xf32, #tpu.memory_space<vmem>>, %arg10: memref<9x1xf32, #tpu.memory_space<vmem>>, %arg11: memref<2x9x1xf32, #tpu.memory_space<vmem>>, %arg12: memref<2x4x16xf32, #tpu.memory_space<vmem>>, %arg13: memref<2x64x16xf32, #tpu.memory_space<vmem>>) attributes {dimension_semantics = [#tpu.dimension_semantics<parallel>, #tpu.dimension_semantics<arbitrary>], iteration_bounds = array<i64: 1, 1>, scalar_prefetch = 0 : i64, scratch_operands = 1 : i64, tpu.core_type = #tpu.core_type<tc>, window_params = [{transform_indices = @transform_0, window_bounds = array<i64: 2, 4, 16>}, {pipeline_mode = #tpu.pipeline_mode<synchronous>, transform_indices = @transform_1, window_bounds = array<i64: 32, 4>}, {pipeline_mode = #tpu.pipeline_mode<synchronous>, transform_indices = @transform_2, window_bounds = array<i64: 32, 1>}, {pipeline_mode = #tpu.pipeline_mode<synchronous>, transform_indices = @transform_3, window_bounds = array<i64: 64, 32>}, {pipeline_mode = #tpu.pipeline_mode<synchronous>, transform_indices = @transform_4, window_bounds = array<i64: 64, 1>}, {pipeline_mode = #tpu.pipeline_mode<synchronous>, transform_indices = @transform_5, window_bounds = array<i64: 32, 64>}, {pipeline_mode = #tpu.pipeline_mode<synchronous>, transform_indices = @transform_6, window_bounds = array<i64: 32, 1>}, {pipeline_mode = #tpu.pipeline_mode<synchronous>, transform_indices = @transform_7, window_bounds = array<i64: 9, 32>}, {pipeline_mode = #tpu.pipeline_mode<synchronous>, transform_indices = @transform_8, window_bounds = array<i64: 9, 1>}, {transform_indices = @transform_9, window_bounds = array<i64: 2, 9, 1>}, {transform_indices = @transform_10, window_bounds = array<i64: 2, 4, 16>}]} {
    %c0_i32 = arith.constant 0 : i32
    %0 = arith.cmpi eq, %arg1, %c0_i32 : i32
    %1 = arith.extui %0 : i1 to i32
    %c0_i32_0 = arith.constant 0 : i32
    %2 = arith.cmpi ne, %1, %c0_i32_0 : i32
    scf.if %2 {
      %cst_32 = arith.constant 0xFF800000 : f32
      %90 = vector.broadcast %cst_32 : f32 to vector<2x64x16xf32>
      %c0_33 = arith.constant 0 : index
      %c0_34 = arith.constant 0 : index
      %c0_35 = arith.constant 0 : index
      %91 = vector.load %arg13[%c0_33, %c0_34, %c0_35] : memref<2x64x16xf32, #tpu.memory_space<vmem>>, vector<2x64x16xf32>
      tpu.vector_store %arg13[%c0_33, %c0_34, %c0_35], %90 {strides = array<i32>} : memref<2x64x16xf32, #tpu.memory_space<vmem>>, vector<2x64x16xf32>,
    } else {
    }
    %c0 = arith.constant 0 : index
    %c0_1 = arith.constant 0 : index
    %3 = vector.load %arg3[%c0, %c0_1] : memref<32x4xf32, #tpu.memory_space<vmem>>, vector<32x4xf32>
    %c0_2 = arith.constant 0 : index
    %c0_3 = arith.constant 0 : index
    %4 = vector.load %arg4[%c0_2, %c0_3] : memref<32x1xf32, #tpu.memory_space<vmem>>, vector<32x1xf32>
    %c0_4 = arith.constant 0 : index
    %c0_5 = arith.constant 0 : index
    %5 = vector.load %arg5[%c0_4, %c0_5] : memref<64x32xf32, #tpu.memory_space<vmem>>, vector<64x32xf32>
    %c0_6 = arith.constant 0 : index
    %c0_7 = arith.constant 0 : index
    %6 = vector.load %arg6[%c0_6, %c0_7] : memref<64x1xf32, #tpu.memory_space<vmem>>, vector<64x1xf32>
    %c0_8 = arith.constant 0 : index
    %c0_9 = arith.constant 0 : index
    %c0_10 = arith.constant 0 : index
    %7 = vector.load %arg2[%c0_8, %c0_9, %c0_10] : memref<2x4x16xf32, #tpu.memory_space<vmem>>, vector<1x4x16xf32>
    %8 = vector.shape_cast %7 : vector<1x4x16xf32> to vector<4x16xf32>
    %9 = vector.extract_strided_slice %3 {offsets = [0, 0], sizes = [32, 1], strides = [1, 1]} : vector<32x4xf32> to vector<32x1xf32>
    %10 = vector.extract_strided_slice %8 {offsets = [0, 0], sizes = [1, 16], strides = [1, 1]} : vector<4x16xf32> to vector<1x16xf32>
    %11 = vector.broadcast %9 : vector<32x1xf32> to vector<32x16xf32>
    %12 = vector.broadcast %10 : vector<1x16xf32> to vector<32x16xf32>
    %13 = arith.mulf %11, %12 : vector<32x16xf32>
    %14 = vector.extract_strided_slice %3 {offsets = [0, 1], sizes = [32, 1], strides = [1, 1]} : vector<32x4xf32> to vector<32x1xf32>
    %15 = vector.extract_strided_slice %8 {offsets = [1, 0], sizes = [1, 16], strides = [1, 1]} : vector<4x16xf32> to vector<1x16xf32>
    %16 = vector.broadcast %14 : vector<32x1xf32> to vector<32x16xf32>
    %17 = vector.broadcast %15 : vector<1x16xf32> to vector<32x16xf32>
    %18 = arith.mulf %16, %17 : vector<32x16xf32>
    %19 = arith.addf %13, %18 : vector<32x16xf32>
    %20 = vector.extract_strided_slice %3 {offsets = [0, 2], sizes = [32, 1], strides = [1, 1]} : vector<32x4xf32> to vector<32x1xf32>
    %21 = vector.extract_strided_slice %8 {offsets = [2, 0], sizes = [1, 16], strides = [1, 1]} : vector<4x16xf32> to vector<1x16xf32>
    %22 = vector.broadcast %20 : vector<32x1xf32> to vector<32x16xf32>
    %23 = vector.broadcast %21 : vector<1x16xf32> to vector<32x16xf32>
    %24 = arith.mulf %22, %23 : vector<32x16xf32>
    %25 = arith.addf %19, %24 : vector<32x16xf32>
    %26 = vector.extract_strided_slice %3 {offsets = [0, 3], sizes = [32, 1], strides = [1, 1]} : vector<32x4xf32> to vector<32x1xf32>
    %27 = vector.extract_strided_slice %8 {offsets = [3, 0], sizes = [1, 16], strides = [1, 1]} : vector<4x16xf32> to vector<1x16xf32>
    %28 = vector.broadcast %26 : vector<32x1xf32> to vector<32x16xf32>
    %29 = vector.broadcast %27 : vector<1x16xf32> to vector<32x16xf32>
    %30 = arith.mulf %28, %29 : vector<32x16xf32>
    %31 = arith.addf %25, %30 : vector<32x16xf32>
    %32 = vector.broadcast %4 : vector<32x1xf32> to vector<32x16xf32>
    %33 = arith.addf %31, %32 : vector<32x16xf32>
    %cst = arith.constant 0.000000e+00 : f32
    %34 = vector.broadcast %cst : f32 to vector<32x16xf32>
    %35 = arith.maximumf %33, %34 : vector<32x16xf32>
    %cst_11 = arith.constant dense<0.000000e+00> : vector<64x16xf32>
    %36 = tpu.matmul %5, %35, %cst_11 {dimension_numbers = #tpu.dot_dimension_numbers<[1], [0], [0], [1], [0, 0, 1, 1], [], []>} : vector<64x32xf32>, vector<32x16xf32>, vector<64x16xf32> -> vector<64x16xf32>
    %37 = vector.broadcast %6 : vector<64x1xf32> to vector<64x16xf32>
    %38 = arith.addf %36, %37 : vector<64x16xf32>
    %cst_12 = arith.constant 0.000000e+00 : f32
    %39 = vector.broadcast %cst_12 : f32 to vector<64x16xf32>
    %40 = arith.maximumf %38, %39 : vector<64x16xf32>
    %c0_13 = arith.constant 0 : index
    %c0_14 = arith.constant 0 : index
    %c0_15 = arith.constant 0 : index
    %41 = vector.load %arg13[%c0_13, %c0_14, %c0_15] : memref<2x64x16xf32, #tpu.memory_space<vmem>>, vector<1x64x16xf32>
    %42 = vector.shape_cast %41 : vector<1x64x16xf32> to vector<64x16xf32>
    %43 = arith.maximumf %42, %40 : vector<64x16xf32>
    %c0_16 = arith.constant 0 : index
    %c0_17 = arith.constant 0 : index
    %c0_18 = arith.constant 0 : index
    %44 = vector.load %arg13[%c0_16, %c0_17, %c0_18] : memref<2x64x16xf32, #tpu.memory_space<vmem>>, vector<1x64x16xf32>
    %45 = vector.shape_cast %44 : vector<1x64x16xf32> to vector<64x16xf32>
    %46 = vector.shape_cast %43 : vector<64x16xf32> to vector<1x64x16xf32>
    tpu.vector_store %arg13[%c0_16, %c0_17, %c0_18], %46 {strides = array<i32>} : memref<2x64x16xf32, #tpu.memory_space<vmem>>, vector<1x64x16xf32>,
    %c1 = arith.constant 1 : index
    %c0_19 = arith.constant 0 : index
    %c0_20 = arith.constant 0 : index
    %47 = vector.load %arg2[%c1, %c0_19, %c0_20] : memref<2x4x16xf32, #tpu.memory_space<vmem>>, vector<1x4x16xf32>
    %48 = vector.shape_cast %47 : vector<1x4x16xf32> to vector<4x16xf32>
    %49 = vector.extract_strided_slice %3 {offsets = [0, 0], sizes = [32, 1], strides = [1, 1]} : vector<32x4xf32> to vector<32x1xf32>
    %50 = vector.extract_strided_slice %48 {offsets = [0, 0], sizes = [1, 16], strides = [1, 1]} : vector<4x16xf32> to vector<1x16xf32>
    %51 = vector.broadcast %49 : vector<32x1xf32> to vector<32x16xf32>
    %52 = vector.broadcast %50 : vector<1x16xf32> to vector<32x16xf32>
    %53 = arith.mulf %51, %52 : vector<32x16xf32>
    %54 = vector.extract_strided_slice %3 {offsets = [0, 1], sizes = [32, 1], strides = [1, 1]} : vector<32x4xf32> to vector<32x1xf32>
    %55 = vector.extract_strided_slice %48 {offsets = [1, 0], sizes = [1, 16], strides = [1, 1]} : vector<4x16xf32> to vector<1x16xf32>
    %56 = vector.broadcast %54 : vector<32x1xf32> to vector<32x16xf32>
    %57 = vector.broadcast %55 : vector<1x16xf32> to vector<32x16xf32>
    %58 = arith.mulf %56, %57 : vector<32x16xf32>
    %59 = arith.addf %53, %58 : vector<32x16xf32>
    %60 = vector.extract_strided_slice %3 {offsets = [0, 2], sizes = [32, 1], strides = [1, 1]} : vector<32x4xf32> to vector<32x1xf32>
    %61 = vector.extract_strided_slice %48 {offsets = [2, 0], sizes = [1, 16], strides = [1, 1]} : vector<4x16xf32> to vector<1x16xf32>
    %62 = vector.broadcast %60 : vector<32x1xf32> to vector<32x16xf32>
    %63 = vector.broadcast %61 : vector<1x16xf32> to vector<32x16xf32>
    %64 = arith.mulf %62, %63 : vector<32x16xf32>
    %65 = arith.addf %59, %64 : vector<32x16xf32>
    %66 = vector.extract_strided_slice %3 {offsets = [0, 3], sizes = [32, 1], strides = [1, 1]} : vector<32x4xf32> to vector<32x1xf32>
    %67 = vector.extract_strided_slice %48 {offsets = [3, 0], sizes = [1, 16], strides = [1, 1]} : vector<4x16xf32> to vector<1x16xf32>
    %68 = vector.broadcast %66 : vector<32x1xf32> to vector<32x16xf32>
    %69 = vector.broadcast %67 : vector<1x16xf32> to vector<32x16xf32>
    %70 = arith.mulf %68, %69 : vector<32x16xf32>
    %71 = arith.addf %65, %70 : vector<32x16xf32>
    %72 = vector.broadcast %4 : vector<32x1xf32> to vector<32x16xf32>
    %73 = arith.addf %71, %72 : vector<32x16xf32>
    %cst_21 = arith.constant 0.000000e+00 : f32
    %74 = vector.broadcast %cst_21 : f32 to vector<32x16xf32>
    %75 = arith.maximumf %73, %74 : vector<32x16xf32>
    %cst_22 = arith.constant dense<0.000000e+00> : vector<64x16xf32>
    %76 = tpu.matmul %5, %75, %cst_22 {dimension_numbers = #tpu.dot_dimension_numbers<[1], [0], [0], [1], [0, 0, 1, 1], [], []>} : vector<64x32xf32>, vector<32x16xf32>, vector<64x16xf32> -> vector<64x16xf32>
    %77 = vector.broadcast %6 : vector<64x1xf32> to vector<64x16xf32>
    %78 = arith.addf %76, %77 : vector<64x16xf32>
    %cst_23 = arith.constant 0.000000e+00 : f32
    %79 = vector.broadcast %cst_23 : f32 to vector<64x16xf32>
    %80 = arith.maximumf %78, %79 : vector<64x16xf32>
    %c1_24 = arith.constant 1 : index
    %c0_25 = arith.constant 0 : index
    %c0_26 = arith.constant 0 : index
    %81 = vector.load %arg13[%c1_24, %c0_25, %c0_26] : memref<2x64x16xf32, #tpu.memory_space<vmem>>, vector<1x64x16xf32>
    %82 = vector.shape_cast %81 : vector<1x64x16xf32> to vector<64x16xf32>
    %83 = arith.maximumf %82, %80 : vector<64x16xf32>
    %c1_27 = arith.constant 1 : index
    %c0_28 = arith.constant 0 : index
    %c0_29 = arith.constant 0 : index
    %84 = vector.load %arg13[%c1_27, %c0_28, %c0_29] : memref<2x64x16xf32, #tpu.memory_space<vmem>>, vector<1x64x16xf32>
    %85 = vector.shape_cast %84 : vector<1x64x16xf32> to vector<64x16xf32>
    %86 = vector.shape_cast %83 : vector<64x16xf32> to vector<1x64x16xf32>
    tpu.vector_store %arg13[%c1_27, %c0_28, %c0_29], %86 {strides = array<i32>} : memref<2x64x16xf32, #tpu.memory_space<vmem>>, vector<1x64x16xf32>,
    %c0_i32_30 = arith.constant 0 : i32
    %87 = arith.cmpi eq, %arg1, %c0_i32_30 : i32
    %88 = arith.extui %87 : i1 to i32
    %c0_i32_31 = arith.constant 0 : i32
    %89 = arith.cmpi ne, %88, %c0_i32_31 : i32
    scf.if %89 {
      %c0_32 = arith.constant 0 : index
      %c0_33 = arith.constant 0 : index
      %90 = vector.load %arg7[%c0_32, %c0_33] : memref<32x64xf32, #tpu.memory_space<vmem>>, vector<32x64xf32>
      %c0_34 = arith.constant 0 : index
      %c0_35 = arith.constant 0 : index
      %91 = vector.load %arg8[%c0_34, %c0_35] : memref<32x1xf32, #tpu.memory_space<vmem>>, vector<32x1xf32>
      %c0_36 = arith.constant 0 : index
      %c0_37 = arith.constant 0 : index
      %92 = vector.load %arg9[%c0_36, %c0_37] : memref<9x32xf32, #tpu.memory_space<vmem>>, vector<9x32xf32>
      %c0_38 = arith.constant 0 : index
      %c0_39 = arith.constant 0 : index
      %93 = vector.load %arg10[%c0_38, %c0_39] : memref<9x1xf32, #tpu.memory_space<vmem>>, vector<9x1xf32>
      %c0_40 = arith.constant 0 : index
      %c0_41 = arith.constant 0 : index
      %c0_42 = arith.constant 0 : index
      %94 = vector.load %arg13[%c0_40, %c0_41, %c0_42] : memref<2x64x16xf32, #tpu.memory_space<vmem>>, vector<1x64x16xf32>
      %95 = vector.shape_cast %94 : vector<1x64x16xf32> to vector<64x16xf32>
      %cst_43 = arith.constant dense<0xFF800000> : vector<64xf32>
      %96 = vector.multi_reduction <maximumf>, %95, %cst_43 [1] : vector<64x16xf32> to vector<64xf32>
      %97 = vector.shape_cast %96 : vector<64xf32> to vector<64x1xf32>
      %cst_44 = arith.constant dense<0.000000e+00> : vector<32x1xf32>
      %98 = tpu.matmul %90, %97, %cst_44 {dimension_numbers = #tpu.dot_dimension_numbers<[1], [0], [0], [1], [0, 0, 1, 1], [], []>} : vector<32x64xf32>, vector<64x1xf32>, vector<32x1xf32> -> vector<32x1xf32>
      %99 = arith.addf %98, %91 : vector<32x1xf32>
      %cst_45 = arith.constant 0.000000e+00 : f32
      %100 = vector.broadcast %cst_45 : f32 to vector<32x1xf32>
      %101 = arith.maximumf %99, %100 : vector<32x1xf32>
      %cst_46 = arith.constant dense<0.000000e+00> : vector<9x1xf32>
      %102 = tpu.matmul %92, %101, %cst_46 {dimension_numbers = #tpu.dot_dimension_numbers<[1], [0], [0], [1], [0, 0, 1, 1], [], []>} : vector<9x32xf32>, vector<32x1xf32>, vector<9x1xf32> -> vector<9x1xf32>
      %103 = arith.addf %102, %93 : vector<9x1xf32>
      %c0_47 = arith.constant 0 : index
      %c0_48 = arith.constant 0 : index
      %c0_49 = arith.constant 0 : index
      %104 = vector.load %arg11[%c0_47, %c0_48, %c0_49] : memref<2x9x1xf32, #tpu.memory_space<vmem>>, vector<1x9x1xf32>
      %105 = vector.shape_cast %104 : vector<1x9x1xf32> to vector<9x1xf32>
      %106 = vector.shape_cast %103 : vector<9x1xf32> to vector<1x9x1xf32>
      tpu.vector_store %arg11[%c0_47, %c0_48, %c0_49], %106 {strides = array<i32>} : memref<2x9x1xf32, #tpu.memory_space<vmem>>, vector<1x9x1xf32>,
      %c0_50 = arith.constant 0 : index
      %c0_51 = arith.constant 0 : index
      %c0_52 = arith.constant 0 : index
      %107 = vector.load %arg2[%c0_50, %c0_51, %c0_52] : memref<2x4x16xf32, #tpu.memory_space<vmem>>, vector<1x4x16xf32>
      %108 = vector.shape_cast %107 : vector<1x4x16xf32> to vector<4x16xf32>
      %109 = vector.extract_strided_slice %103 {offsets = [0, 0], sizes = [1, 1], strides = [1, 1]} : vector<9x1xf32> to vector<1x1xf32>
      %110 = vector.extract_strided_slice %108 {offsets = [0, 0], sizes = [1, 16], strides = [1, 1]} : vector<4x16xf32> to vector<1x16xf32>
      %111 = vector.broadcast %109 : vector<1x1xf32> to vector<1x16xf32>
      %112 = arith.mulf %111, %110 : vector<1x16xf32>
      %113 = vector.extract_strided_slice %103 {offsets = [1, 0], sizes = [1, 1], strides = [1, 1]} : vector<9x1xf32> to vector<1x1xf32>
      %114 = vector.extract_strided_slice %108 {offsets = [1, 0], sizes = [1, 16], strides = [1, 1]} : vector<4x16xf32> to vector<1x16xf32>
      %115 = vector.broadcast %113 : vector<1x1xf32> to vector<1x16xf32>
      %116 = arith.mulf %115, %114 : vector<1x16xf32>
      %117 = arith.addf %112, %116 : vector<1x16xf32>
      %118 = vector.extract_strided_slice %103 {offsets = [2, 0], sizes = [1, 1], strides = [1, 1]} : vector<9x1xf32> to vector<1x1xf32>
      %119 = vector.extract_strided_slice %108 {offsets = [2, 0], sizes = [1, 16], strides = [1, 1]} : vector<4x16xf32> to vector<1x16xf32>
      %120 = vector.broadcast %118 : vector<1x1xf32> to vector<1x16xf32>
      %121 = arith.mulf %120, %119 : vector<1x16xf32>
      %122 = arith.addf %117, %121 : vector<1x16xf32>
      %123 = vector.extract_strided_slice %103 {offsets = [3, 0], sizes = [1, 1], strides = [1, 1]} : vector<9x1xf32> to vector<1x1xf32>
      %124 = vector.extract_strided_slice %108 {offsets = [0, 0], sizes = [1, 16], strides = [1, 1]} : vector<4x16xf32> to vector<1x16xf32>
      %125 = vector.broadcast %123 : vector<1x1xf32> to vector<1x16xf32>
      %126 = arith.mulf %125, %124 : vector<1x16xf32>
      %127 = vector.extract_strided_slice %103 {offsets = [4, 0], sizes = [1, 1], strides = [1, 1]} : vector<9x1xf32> to vector<1x1xf32>
      %128 = vector.extract_strided_slice %108 {offsets = [1, 0], sizes = [1, 16], strides = [1, 1]} : vector<4x16xf32> to vector<1x16xf32>
      %129 = vector.broadcast %127 : vector<1x1xf32> to vector<1x16xf32>
      %130 = arith.mulf %129, %128 : vector<1x16xf32>
      %131 = arith.addf %126, %130 : vector<1x16xf32>
      %132 = vector.extract_strided_slice %103 {offsets = [5, 0], sizes = [1, 1], strides = [1, 1]} : vector<9x1xf32> to vector<1x1xf32>
      %133 = vector.extract_strided_slice %108 {offsets = [2, 0], sizes = [1, 16], strides = [1, 1]} : vector<4x16xf32> to vector<1x16xf32>
      %134 = vector.broadcast %132 : vector<1x1xf32> to vector<1x16xf32>
      %135 = arith.mulf %134, %133 : vector<1x16xf32>
      %136 = arith.addf %131, %135 : vector<1x16xf32>
      %137 = vector.extract_strided_slice %103 {offsets = [6, 0], sizes = [1, 1], strides = [1, 1]} : vector<9x1xf32> to vector<1x1xf32>
      %138 = vector.extract_strided_slice %108 {offsets = [0, 0], sizes = [1, 16], strides = [1, 1]} : vector<4x16xf32> to vector<1x16xf32>
      %139 = vector.broadcast %137 : vector<1x1xf32> to vector<1x16xf32>
      %140 = arith.mulf %139, %138 : vector<1x16xf32>
      %141 = vector.extract_strided_slice %103 {offsets = [7, 0], sizes = [1, 1], strides = [1, 1]} : vector<9x1xf32> to vector<1x1xf32>
      %142 = vector.extract_strided_slice %108 {offsets = [1, 0], sizes = [1, 16], strides = [1, 1]} : vector<4x16xf32> to vector<1x16xf32>
      %143 = vector.broadcast %141 : vector<1x1xf32> to vector<1x16xf32>
      %144 = arith.mulf %143, %142 : vector<1x16xf32>
      %145 = arith.addf %140, %144 : vector<1x16xf32>
      %146 = vector.extract_strided_slice %103 {offsets = [8, 0], sizes = [1, 1], strides = [1, 1]} : vector<9x1xf32> to vector<1x1xf32>
      %147 = vector.extract_strided_slice %108 {offsets = [2, 0], sizes = [1, 16], strides = [1, 1]} : vector<4x16xf32> to vector<1x16xf32>
      %148 = vector.broadcast %146 : vector<1x1xf32> to vector<1x16xf32>
      %149 = arith.mulf %148, %147 : vector<1x16xf32>
      %150 = arith.addf %145, %149 : vector<1x16xf32>
      %151 = vector.extract_strided_slice %108 {offsets = [3, 0], sizes = [1, 16], strides = [1, 1]} : vector<4x16xf32> to vector<1x16xf32>
      %152 = tpu.concatenate %122, %136, %150, %151 in 0 : vector<1x16xf32>, vector<1x16xf32>, vector<1x16xf32>, vector<1x16xf32> -> vector<4x16xf32>
      %c0_53 = arith.constant 0 : index
      %c0_54 = arith.constant 0 : index
      %c0_55 = arith.constant 0 : index
      %153 = vector.load %arg12[%c0_53, %c0_54, %c0_55] : memref<2x4x16xf32, #tpu.memory_space<vmem>>, vector<1x4x16xf32>
      %154 = vector.shape_cast %153 : vector<1x4x16xf32> to vector<4x16xf32>
      %155 = vector.shape_cast %152 : vector<4x16xf32> to vector<1x4x16xf32>
      tpu.vector_store %arg12[%c0_53, %c0_54, %c0_55], %155 {strides = array<i32>} : memref<2x4x16xf32, #tpu.memory_space<vmem>>, vector<1x4x16xf32>,
      %c1_56 = arith.constant 1 : index
      %c0_57 = arith.constant 0 : index
      %c0_58 = arith.constant 0 : index
      %156 = vector.load %arg13[%c1_56, %c0_57, %c0_58] : memref<2x64x16xf32, #tpu.memory_space<vmem>>, vector<1x64x16xf32>
      %157 = vector.shape_cast %156 : vector<1x64x16xf32> to vector<64x16xf32>
      %cst_59 = arith.constant dense<0xFF800000> : vector<64xf32>
      %158 = vector.multi_reduction <maximumf>, %157, %cst_59 [1] : vector<64x16xf32> to vector<64xf32>
      %159 = vector.shape_cast %158 : vector<64xf32> to vector<64x1xf32>
      %cst_60 = arith.constant dense<0.000000e+00> : vector<32x1xf32>
      %160 = tpu.matmul %90, %159, %cst_60 {dimension_numbers = #tpu.dot_dimension_numbers<[1], [0], [0], [1], [0, 0, 1, 1], [], []>} : vector<32x64xf32>, vector<64x1xf32>, vector<32x1xf32> -> vector<32x1xf32>
      %161 = arith.addf %160, %91 : vector<32x1xf32>
      %cst_61 = arith.constant 0.000000e+00 : f32
      %162 = vector.broadcast %cst_61 : f32 to vector<32x1xf32>
      %163 = arith.maximumf %161, %162 : vector<32x1xf32>
      %cst_62 = arith.constant dense<0.000000e+00> : vector<9x1xf32>
      %164 = tpu.matmul %92, %163, %cst_62 {dimension_numbers = #tpu.dot_dimension_numbers<[1], [0], [0], [1], [0, 0, 1, 1], [], []>} : vector<9x32xf32>, vector<32x1xf32>, vector<9x1xf32> -> vector<9x1xf32>
      %165 = arith.addf %164, %93 : vector<9x1xf32>
      %c1_63 = arith.constant 1 : index
      %c0_64 = arith.constant 0 : index
      %c0_65 = arith.constant 0 : index
      %166 = vector.load %arg11[%c1_63, %c0_64, %c0_65] : memref<2x9x1xf32, #tpu.memory_space<vmem>>, vector<1x9x1xf32>
      %167 = vector.shape_cast %166 : vector<1x9x1xf32> to vector<9x1xf32>
      %168 = vector.shape_cast %165 : vector<9x1xf32> to vector<1x9x1xf32>
      tpu.vector_store %arg11[%c1_63, %c0_64, %c0_65], %168 {strides = array<i32>} : memref<2x9x1xf32, #tpu.memory_space<vmem>>, vector<1x9x1xf32>,
      %c1_66 = arith.constant 1 : index
      %c0_67 = arith.constant 0 : index
      %c0_68 = arith.constant 0 : index
      %169 = vector.load %arg2[%c1_66, %c0_67, %c0_68] : memref<2x4x16xf32, #tpu.memory_space<vmem>>, vector<1x4x16xf32>
      %170 = vector.shape_cast %169 : vector<1x4x16xf32> to vector<4x16xf32>
      %171 = vector.extract_strided_slice %165 {offsets = [0, 0], sizes = [1, 1], strides = [1, 1]} : vector<9x1xf32> to vector<1x1xf32>
      %172 = vector.extract_strided_slice %170 {offsets = [0, 0], sizes = [1, 16], strides = [1, 1]} : vector<4x16xf32> to vector<1x16xf32>
      %173 = vector.broadcast %171 : vector<1x1xf32> to vector<1x16xf32>
      %174 = arith.mulf %173, %172 : vector<1x16xf32>
      %175 = vector.extract_strided_slice %165 {offsets = [1, 0], sizes = [1, 1], strides = [1, 1]} : vector<9x1xf32> to vector<1x1xf32>
      %176 = vector.extract_strided_slice %170 {offsets = [1, 0], sizes = [1, 16], strides = [1, 1]} : vector<4x16xf32> to vector<1x16xf32>
      %177 = vector.broadcast %175 : vector<1x1xf32> to vector<1x16xf32>
      %178 = arith.mulf %177, %176 : vector<1x16xf32>
      %179 = arith.addf %174, %178 : vector<1x16xf32>
      %180 = vector.extract_strided_slice %165 {offsets = [2, 0], sizes = [1, 1], strides = [1, 1]} : vector<9x1xf32> to vector<1x1xf32>
      %181 = vector.extract_strided_slice %170 {offsets = [2, 0], sizes = [1, 16], strides = [1, 1]} : vector<4x16xf32> to vector<1x16xf32>
      %182 = vector.broadcast %180 : vector<1x1xf32> to vector<1x16xf32>
      %183 = arith.mulf %182, %181 : vector<1x16xf32>
      %184 = arith.addf %179, %183 : vector<1x16xf32>
      %185 = vector.extract_strided_slice %165 {offsets = [3, 0], sizes = [1, 1], strides = [1, 1]} : vector<9x1xf32> to vector<1x1xf32>
      %186 = vector.extract_strided_slice %170 {offsets = [0, 0], sizes = [1, 16], strides = [1, 1]} : vector<4x16xf32> to vector<1x16xf32>
      %187 = vector.broadcast %185 : vector<1x1xf32> to vector<1x16xf32>
      %188 = arith.mulf %187, %186 : vector<1x16xf32>
      %189 = vector.extract_strided_slice %165 {offsets = [4, 0], sizes = [1, 1], strides = [1, 1]} : vector<9x1xf32> to vector<1x1xf32>
      %190 = vector.extract_strided_slice %170 {offsets = [1, 0], sizes = [1, 16], strides = [1, 1]} : vector<4x16xf32> to vector<1x16xf32>
      %191 = vector.broadcast %189 : vector<1x1xf32> to vector<1x16xf32>
      %192 = arith.mulf %191, %190 : vector<1x16xf32>
      %193 = arith.addf %188, %192 : vector<1x16xf32>
      %194 = vector.extract_strided_slice %165 {offsets = [5, 0], sizes = [1, 1], strides = [1, 1]} : vector<9x1xf32> to vector<1x1xf32>
      %195 = vector.extract_strided_slice %170 {offsets = [2, 0], sizes = [1, 16], strides = [1, 1]} : vector<4x16xf32> to vector<1x16xf32>
      %196 = vector.broadcast %194 : vector<1x1xf32> to vector<1x16xf32>
      %197 = arith.mulf %196, %195 : vector<1x16xf32>
      %198 = arith.addf %193, %197 : vector<1x16xf32>
      %199 = vector.extract_strided_slice %165 {offsets = [6, 0], sizes = [1, 1], strides = [1, 1]} : vector<9x1xf32> to vector<1x1xf32>
      %200 = vector.extract_strided_slice %170 {offsets = [0, 0], sizes = [1, 16], strides = [1, 1]} : vector<4x16xf32> to vector<1x16xf32>
      %201 = vector.broadcast %199 : vector<1x1xf32> to vector<1x16xf32>
      %202 = arith.mulf %201, %200 : vector<1x16xf32>
      %203 = vector.extract_strided_slice %165 {offsets = [7, 0], sizes = [1, 1], strides = [1, 1]} : vector<9x1xf32> to vector<1x1xf32>
      %204 = vector.extract_strided_slice %170 {offsets = [1, 0], sizes = [1, 16], strides = [1, 1]} : vector<4x16xf32> to vector<1x16xf32>
      %205 = vector.broadcast %203 : vector<1x1xf32> to vector<1x16xf32>
      %206 = arith.mulf %205, %204 : vector<1x16xf32>
      %207 = arith.addf %202, %206 : vector<1x16xf32>
      %208 = vector.extract_strided_slice %165 {offsets = [8, 0], sizes = [1, 1], strides = [1, 1]} : vector<9x1xf32> to vector<1x1xf32>
      %209 = vector.extract_strided_slice %170 {offsets = [2, 0], sizes = [1, 16], strides = [1, 1]} : vector<4x16xf32> to vector<1x16xf32>
      %210 = vector.broadcast %208 : vector<1x1xf32> to vector<1x16xf32>
      %211 = arith.mulf %210, %209 : vector<1x16xf32>
      %212 = arith.addf %207, %211 : vector<1x16xf32>
      %213 = vector.extract_strided_slice %170 {offsets = [3, 0], sizes = [1, 16], strides = [1, 1]} : vector<4x16xf32> to vector<1x16xf32>
      %214 = tpu.concatenate %184, %198, %212, %213 in 0 : vector<1x16xf32>, vector<1x16xf32>, vector<1x16xf32>, vector<1x16xf32> -> vector<4x16xf32>
      %c1_69 = arith.constant 1 : index
      %c0_70 = arith.constant 0 : index
      %c0_71 = arith.constant 0 : index
      %215 = vector.load %arg12[%c1_69, %c0_70, %c0_71] : memref<2x4x16xf32, #tpu.memory_space<vmem>>, vector<1x4x16xf32>
      %216 = vector.shape_cast %215 : vector<1x4x16xf32> to vector<4x16xf32>
      %217 = vector.shape_cast %214 : vector<4x16xf32> to vector<1x4x16xf32>
      tpu.vector_store %arg12[%c1_69, %c0_70, %c0_71], %217 {strides = array<i32>} : memref<2x4x16xf32, #tpu.memory_space<vmem>>, vector<1x4x16xf32>,
    } else {
    }
    return
  }
  func.func @transform_0(%arg0: i32, %arg1: i32) -> (i32, i32, i32) {
    %c0_i32 = arith.constant 0 : i32
    %c0_i32_0 = arith.constant 0 : i32
    return %arg0, %c0_i32, %arg1 : i32, i32, i32
  }
  func.func @transform_1(%arg0: i32, %arg1: i32) -> (i32, i32) {
    %c0_i32 = arith.constant 0 : i32
    %c0_i32_0 = arith.constant 0 : i32
    %c0_i32_1 = arith.constant 0 : i32
    return %c0_i32, %c0_i32_0 : i32, i32
  }
  func.func @transform_2(%arg0: i32, %arg1: i32) -> (i32, i32) {
    %c0_i32 = arith.constant 0 : i32
    %c0_i32_0 = arith.constant 0 : i32
    %c0_i32_1 = arith.constant 0 : i32
    return %c0_i32, %c0_i32_0 : i32, i32
  }
  func.func @transform_3(%arg0: i32, %arg1: i32) -> (i32, i32) {
    %c0_i32 = arith.constant 0 : i32
    %c0_i32_0 = arith.constant 0 : i32
    %c0_i32_1 = arith.constant 0 : i32
    return %c0_i32, %c0_i32_0 : i32, i32
  }
  func.func @transform_4(%arg0: i32, %arg1: i32) -> (i32, i32) {
    %c0_i32 = arith.constant 0 : i32
    %c0_i32_0 = arith.constant 0 : i32
    %c0_i32_1 = arith.constant 0 : i32
    return %c0_i32, %c0_i32_0 : i32, i32
  }
  func.func @transform_5(%arg0: i32, %arg1: i32) -> (i32, i32) {
    %c0_i32 = arith.constant 0 : i32
    %c0_i32_0 = arith.constant 0 : i32
    %c0_i32_1 = arith.constant 0 : i32
    return %c0_i32, %c0_i32_0 : i32, i32
  }
  func.func @transform_6(%arg0: i32, %arg1: i32) -> (i32, i32) {
    %c0_i32 = arith.constant 0 : i32
    %c0_i32_0 = arith.constant 0 : i32
    %c0_i32_1 = arith.constant 0 : i32
    return %c0_i32, %c0_i32_0 : i32, i32
  }
  func.func @transform_7(%arg0: i32, %arg1: i32) -> (i32, i32) {
    %c0_i32 = arith.constant 0 : i32
    %c0_i32_0 = arith.constant 0 : i32
    %c0_i32_1 = arith.constant 0 : i32
    return %c0_i32, %c0_i32_0 : i32, i32
  }
  func.func @transform_8(%arg0: i32, %arg1: i32) -> (i32, i32) {
    %c0_i32 = arith.constant 0 : i32
    %c0_i32_0 = arith.constant 0 : i32
    %c0_i32_1 = arith.constant 0 : i32
    return %c0_i32, %c0_i32_0 : i32, i32
  }
  func.func @transform_9(%arg0: i32, %arg1: i32) -> (i32, i32, i32) {
    %c0_i32 = arith.constant 0 : i32
    %c0_i32_0 = arith.constant 0 : i32
    %c0_i32_1 = arith.constant 0 : i32
    return %arg0, %c0_i32, %c0_i32_0 : i32, i32, i32
  }
  func.func @transform_10(%arg0: i32, %arg1: i32) -> (i32, i32, i32) {
    %c0_i32 = arith.constant 0 : i32
    %c0_i32_0 = arith.constant 0 : i32
    %c0_i32_1 = arith.constant 0 : i32
    return %arg0, %c0_i32, %c0_i32_0 : i32, i32, i32
  }
}

</mosaic_0001>

<llo_original>
// kernel: tnet_forward.1
$region0: #{tnet_forward.1}
  #allocation0 [shape = 'u32[]', space=smem, size = 0x4, offset = 0x4, fixed_abs, tag = 'smem constant byte address 0x4 - core index']
  #allocation1 [shape = 'u32[72,128]{1,0:T(1,128)}', space=vmem, size = 0x9000, scoped, tag = 'internal scratch']
  #allocation2 [shape = 'f32[2,64,16]{2,1,0:T(8,128)}', space=vmem, size = 0x10000, scoped, tag = 'scratch operand']
  %s0 = inlined_call_operand.vmem [shape: f32[2,4,16], index: 0, kind: input, shape index: {}]
  %s1 = inlined_call_operand.vmem [shape: f32[32,4], index: 1, kind: input, shape index: {}]
  %s2 = inlined_call_operand.vmem [shape: f32[32,1], index: 2, kind: input, shape index: {}]
  %s3 = inlined_call_operand.vmem [shape: f32[64,32], index: 3, kind: input, shape index: {}]
  %s4 = inlined_call_operand.vmem [shape: f32[64,1], index: 4, kind: input, shape index: {}]
  %s5 = inlined_call_operand.vmem [shape: f32[32,64], index: 5, kind: input, shape index: {}]
  %s6 = inlined_call_operand.vmem [shape: f32[32,1], index: 6, kind: input, shape index: {}]
  %s7 = inlined_call_operand.vmem [shape: f32[9,32], index: 7, kind: input, shape index: {}]
  %s8 = inlined_call_operand.vmem [shape: f32[9,1], index: 8, kind: input, shape index: {}]
  %s9 = inlined_call_operand.vmem [shape: f32[2,9,1], index: 9, kind: output, shape index: {0}]
  %s10 = inlined_call_operand.hbm [shape: f32[2,4,16], index: 10, kind: output, shape index: {1}]
  %11 = xla_tuple %s9, %s10
  %s12 = sld [smem:[#allocation0]]
  $region62: #{tnet_forward.1} parent=0
    _
  %s14 = ssub.s32 1, %s12
  %s15 = scalar_select 0, %s14, %s12
  $region1: #{tnet_forward.1} parent=0
    #allocation3 [shape = 'u8[4096]{0}', space=vmem, size = 0x1000, scoped, tag = 'output window, operand 1, single buffered']
    #allocation4 [shape = 's32[1]{0}', space=sflag, size = 0x4, scoped, tag = 'scoped memory for tnet_forward.1']
    %16 = vsyncpa [#allocation4], 0
    // Predicated region
    $region2: #{tnet_forward.1} parent=1 // pred_check
      _
    $region3: #{tnet_forward.1} parent=1 // pred_check_branch
      %18 = sbr.rel (0) target = $region5
    $region4: #{tnet_forward.1} parent=1 // pred_region
      _
    $region5: #{tnet_forward.1} parent=1 // pred_fallthru
      _
    // Predicated region
    $region6: #{tnet_forward.1} parent=1 // pred_check
      _
    $region7: #{tnet_forward.1} parent=1 // pred_check_branch
      %20 = sbr.rel (0) target = $region9
    $region8: #{tnet_forward.1} parent=1 // pred_region
      _
    $region9: #{tnet_forward.1} parent=1 // pred_fallthru
      _
    // Predicated region
    $region10: #{tnet_forward.1} parent=1 // pred_check
      _
    $region11: #{tnet_forward.1} parent=1 // pred_check_branch
      %22 = sbr.rel (0) target = $region13
    $region12: #{tnet_forward.1} parent=1 // pred_region
      _
    $region13: #{tnet_forward.1} parent=1 // pred_fallthru
      _
    // Predicated region
    $region14: #{tnet_forward.1} parent=1 // pred_check
      _
    $region15: #{tnet_forward.1} parent=1 // pred_check_branch
      %24 = sbr.rel (0) target = $region17
    $region16: #{tnet_forward.1} parent=1 // pred_region
      _
    $region17: #{tnet_forward.1} parent=1 // pred_fallthru
      _
    // Predicated region
    $region18: #{tnet_forward.1} parent=1 // pred_check
      _
    $region19: #{tnet_forward.1} parent=1 // pred_check_branch
      %26 = sbr.rel (0) target = $region21
    $region20: #{tnet_forward.1} parent=1 // pred_region
      _
    $region21: #{tnet_forward.1} parent=1 // pred_fallthru
      _
    // Predicated region
    $region22: #{tnet_forward.1} parent=1 // pred_check
      _
    $region23: #{tnet_forward.1} parent=1 // pred_check_branch
      %28 = sbr.rel (0) target = $region25
    $region24: #{tnet_forward.1} parent=1 // pred_region
      _
    $region25: #{tnet_forward.1} parent=1 // pred_fallthru
      _
    // Predicated region
    $region26: #{tnet_forward.1} parent=1 // pred_check
      _
    $region27: #{tnet_forward.1} parent=1 // pred_check_branch
      %30 = sbr.rel (0) target = $region29
    $region28: #{tnet_forward.1} parent=1 // pred_region
      _
    $region29: #{tnet_forward.1} parent=1 // pred_fallthru
      _
    // Predicated region
    $region30: #{tnet_forward.1} parent=1 // pred_check
      _
    $region31: #{tnet_forward.1} parent=1 // pred_check_branch
      %32 = sbr.rel (0) target = $region33
    $region32: #{tnet_forward.1} parent=1 // pred_region
      _
    $region33: #{tnet_forward.1} parent=1 // pred_fallthru
      _
    // Predicated region
    $region34: #{tnet_forward.1} parent=1 // pred_check
      _
    $region35: #{tnet_forward.1} parent=1 // pred_check_branch
      %34 = sbr.rel (0) target = $region37
    $region36: #{tnet_forward.1} parent=1 // pred_region
      _
    $region37: #{tnet_forward.1} parent=1 // pred_fallthru
      _
    %p35 = scmp.eq.s32.totalorder 0, 0
    // Predicated region
    $region38: #{tnet_forward.1} parent=1 // pred_check
      %p36 = pneg %p35
    $region39: #{tnet_forward.1} parent=1 // pred_check_branch
      %38 = sbr.rel (%p36) target = $region41
    $region40: #{tnet_forward.1} parent=1 // pred_region
      %vm39 = vcmask 130048
      %40 = vst.msk [vmem:[#allocation2] sm:$0xff] %vm39, -inf
      %41 = vst.msk [vmem:[#allocation2 + $0x8] sm:$0xff] %vm39, -inf
      %42 = vst.msk [vmem:[#allocation2 + $0x10] sm:$0xff] %vm39, -inf
      %43 = vst.msk [vmem:[#allocation2 + $0x18] sm:$0xff] %vm39, -inf
      %44 = vst.msk [vmem:[#allocation2 + $0x20] sm:$0xff] %vm39, -inf
      %45 = vst.msk [vmem:[#allocation2 + $0x28] sm:$0xff] %vm39, -inf
      %46 = vst.msk [vmem:[#allocation2 + $0x30] sm:$0xff] %vm39, -inf
      %47 = vst.msk [vmem:[#allocation2 + $0x38] sm:$0xff] %vm39, -inf
      %48 = vst.msk [vmem:[#allocation2 + $0x40] sm:$0xff] %vm39, -inf
      %49 = vst.msk [vmem:[#allocation2 + $0x48] sm:$0xff] %vm39, -inf
      %50 = vst.msk [vmem:[#allocation2 + $0x50] sm:$0xff] %vm39, -inf
      %51 = vst.msk [vmem:[#allocation2 + $0x58] sm:$0xff] %vm39, -inf
      %52 = vst.msk [vmem:[#allocation2 + $0x60] sm:$0xff] %vm39, -inf
      %53 = vst.msk [vmem:[#allocation2 + $0x68] sm:$0xff] %vm39, -inf
      %54 = vst.msk [vmem:[#allocation2 + $0x70] sm:$0xff] %vm39, -inf
      %55 = vst.msk [vmem:[#allocation2 + $0x78] sm:$0xff] %vm39, -inf
    $region41: #{tnet_forward.1} parent=1 // pred_fallthru
      _
    %v56 = vld [vmem:[%s1] sm:$0xff]
    %v57 = vld [vmem:[%s1 + $0x8] sm:$0xff]
    %v58 = vld [vmem:[%s1 + $0x10] sm:$0xff]
    %v59 = vld [vmem:[%s1 + $0x18] sm:$0xff]
    %v60 = vld [vmem:[%s2] sm:$0xff]
    %v61 = vld [vmem:[%s2 + $0x8] sm:$0xff]
    %v62 = vld [vmem:[%s2 + $0x10] sm:$0xff]
    %v63 = vld [vmem:[%s2 + $0x18] sm:$0xff]
    %v64 = vld [vmem:[%s3] sm:$0xff]
    %v65 = vld [vmem:[%s3 + $0x8] sm:$0xff]
    %v66 = vld [vmem:[%s3 + $0x10] sm:$0xff]
    %v67 = vld [vmem:[%s3 + $0x18] sm:$0xff]
    %v68 = vld [vmem:[%s3 + $0x20] sm:$0xff]
    %v69 = vld [vmem:[%s3 + $0x28] sm:$0xff]
    %v70 = vld [vmem:[%s3 + $0x30] sm:$0xff]
    %v71 = vld [vmem:[%s3 + $0x38] sm:$0xff]
    %v72 = vld [vmem:[%s4] sm:$0xff]
    %v73 = vld [vmem:[%s4 + $0x8] sm:$0xff]
    %v74 = vld [vmem:[%s4 + $0x10] sm:$0xff]
    %v75 = vld [vmem:[%s4 + $0x18] sm:$0xff]
    %v76 = vld [vmem:[%s4 + $0x20] sm:$0xff]
    %v77 = vld [vmem:[%s4 + $0x28] sm:$0xff]
    %v78 = vld [vmem:[%s4 + $0x30] sm:$0xff]
    %v79 = vld [vmem:[%s4 + $0x38] sm:$0xff]
    %v80 = vld [vmem:[%s0] sm:$0xf]
    %82 = vset.pattern.permute.xlu0 0
    %83 = vperm.xlu0 %82, %v56
    %v84 = vpop.permute.xlu0 %83
    %87 = vset.pattern.permute.xlu0 0
    %88 = vperm.xlu0 %87, %v57
    %v89 = vpop.permute.xlu0 %88
    %92 = vset.pattern.permute.xlu0 0
    %93 = vperm.xlu0 %92, %v58
    %v94 = vpop.permute.xlu0 %93
    %97 = vset.pattern.permute.xlu0 0
    %98 = vperm.xlu0 %97, %v59
    %v99 = vpop.permute.xlu0 %98
    %v101 = vperm.slane %v80, 0
    %v102 = vmul.f32 %v84, %v101
    %v103 = vmul.f32 %v89, %v101
    %v104 = vmul.f32 %v94, %v101
    %v105 = vmul.f32 %v99, %v101
    %106 = vset.pattern.permute.xlu0 1
    %107 = vperm.xlu0 %106, %v56
    %v108 = vpop.permute.xlu0 %107
    %110 = vset.pattern.permute.xlu0 1
    %111 = vperm.xlu0 %110, %v57
    %v112 = vpop.permute.xlu0 %111
    %114 = vset.pattern.permute.xlu0 1
    %115 = vperm.xlu0 %114, %v58
    %v116 = vpop.permute.xlu0 %115
    %118 = vset.pattern.permute.xlu0 1
    %119 = vperm.xlu0 %118, %v59
    %v120 = vpop.permute.xlu0 %119
    %v122 = vperm.slane %v80, 1
    %v123 = vmul.f32 %v108, %v122
    %v124 = vmul.f32 %v112, %v122
    %v125 = vmul.f32 %v116, %v122
    %v126 = vmul.f32 %v120, %v122
    %v127 = vadd.f32 %v102, %v123
    %v128 = vadd.f32 %v103, %v124
    %v129 = vadd.f32 %v104, %v125
    %v130 = vadd.f32 %v105, %v126
    %131 = vset.pattern.permute.xlu0 2
    %132 = vperm.xlu0 %131, %v56
    %v133 = vpop.permute.xlu0 %132
    %135 = vset.pattern.permute.xlu0 2
    %136 = vperm.xlu0 %135, %v57
    %v137 = vpop.permute.xlu0 %136
    %139 = vset.pattern.permute.xlu0 2
    %140 = vperm.xlu0 %139, %v58
    %v141 = vpop.permute.xlu0 %140
    %143 = vset.pattern.permute.xlu0 2
    %144 = vperm.xlu0 %143, %v59
    %v145 = vpop.permute.xlu0 %144
    %v147 = vperm.slane %v80, 2
    %v148 = vmul.f32 %v133, %v147
    %v149 = vmul.f32 %v137, %v147
    %v150 = vmul.f32 %v141, %v147
    %v151 = vmul.f32 %v145, %v147
    %v152 = vadd.f32 %v127, %v148
    %v153 = vadd.f32 %v128, %v149
    %v154 = vadd.f32 %v129, %v150
    %v155 = vadd.f32 %v130, %v151
    %156 = vset.pattern.permute.xlu0 3
    %157 = vperm.xlu0 %156, %v56
    %v158 = vpop.permute.xlu0 %157
    %160 = vset.pattern.permute.xlu0 3
    %161 = vperm.xlu0 %160, %v57
    %v162 = vpop.permute.xlu0 %161
    %164 = vset.pattern.permute.xlu0 3
    %165 = vperm.xlu0 %164, %v58
    %v166 = vpop.permute.xlu0 %165
    %168 = vset.pattern.permute.xlu0 3
    %169 = vperm.xlu0 %168, %v59
    %v170 = vpop.permute.xlu0 %169
    %v172 = vperm.slane %v80, 3
    %v173 = vmul.f32 %v158, %v172
    %v174 = vmul.f32 %v162, %v172
    %v175 = vmul.f32 %v166, %v172
    %v176 = vmul.f32 %v170, %v172
    %v177 = vadd.f32 %v152, %v173
    %v178 = vadd.f32 %v153, %v174
    %v179 = vadd.f32 %v154, %v175
    %v180 = vadd.f32 %v155, %v176
    %182 = vset.pattern.permute.xlu0 0
    %183 = vperm.xlu0 %182, %v60
    %v184 = vpop.permute.xlu0 %183
    %187 = vset.pattern.permute.xlu0 0
    %188 = vperm.xlu0 %187, %v61
    %v189 = vpop.permute.xlu0 %188
    %192 = vset.pattern.permute.xlu0 0
    %193 = vperm.xlu0 %192, %v62
    %v194 = vpop.permute.xlu0 %193
    %197 = vset.pattern.permute.xlu0 0
    %198 = vperm.xlu0 %197, %v63
    %v199 = vpop.permute.xlu0 %198
    %v201 = vadd.f32 %v177, %v184
    %v202 = vadd.f32 %v178, %v189
    %v203 = vadd.f32 %v179, %v194
    %v204 = vadd.f32 %v180, %v199
    %v205 = vmax.f32 %v201, 0.0
    %v206 = vmax.f32 %v202, 0.0
    %v207 = vmax.f32 %v203, 0.0
    %v208 = vmax.f32 %v204, 0.0
    %210 = vset.pattern.permute.xlu0 0
    %211 = vperm.xlu0 %210, %v72
    %v212 = vpop.permute.xlu0 %211
    %215 = vset.pattern.permute.xlu0 0
    %216 = vperm.xlu0 %215, %v73
    %v217 = vpop.permute.xlu0 %216
    %220 = vset.pattern.permute.xlu0 0
    %221 = vperm.xlu0 %220, %v74
    %v222 = vpop.permute.xlu0 %221
    %225 = vset.pattern.permute.xlu0 0
    %226 = vperm.xlu0 %225, %v75
    %v227 = vpop.permute.xlu0 %226
    %230 = vset.pattern.permute.xlu0 0
    %231 = vperm.xlu0 %230, %v76
    %v232 = vpop.permute.xlu0 %231
    %235 = vset.pattern.permute.xlu0 0
    %236 = vperm.xlu0 %235, %v77
    %v237 = vpop.permute.xlu0 %236
    %240 = vset.pattern.permute.xlu0 0
    %241 = vperm.xlu0 %240, %v78
    %v242 = vpop.permute.xlu0 %241
    %245 = vset.pattern.permute.xlu0 0
    %246 = vperm.xlu0 %245, %v79
    %v247 = vpop.permute.xlu0 %246
    %vm249 = vcmask 261120
    %v251 = vsel %vm249, %v64, 0
    %v254 = vsel %vm249, %v65, 0
    %v257 = vsel %vm249, %v66, 0
    %v260 = vsel %vm249, %v67, 0
    %v263 = vsel %vm249, %v68, 0
    %v266 = vsel %vm249, %v69, 0
    %v269 = vsel %vm249, %v70, 0
    %v272 = vsel %vm249, %v71, 0
    %274 = vmatpush.msra.mxu0 0.0
    %275 = vmatpush.msra.mxu0 0.0
    %276 = vmatpush.msra.mxu0 0.0
    %277 = vmatpush.msra.mxu0 0.0
    %278 = vmatpush.msra.mxu0 0.0
    %279 = vmatpush.msra.mxu0 0.0
    %280 = vmatpush.msra.mxu0 0.0
    %281 = vmatpush.msra.mxu0 0.0
    %282 = vmatpush.msra.mxu0 0.0
    %283 = vmatpush.msra.mxu0 0.0
    %284 = vmatpush.msra.mxu0 0.0
    %285 = vmatpush.msra.mxu0 0.0
    %286 = vmatpush.msra.mxu0 %v208
    %287 = vmatpush.msra.mxu0 %v207
    %288 = vmatpush.msra.mxu0 %v206
    %289 = vmatpush.msra.mxu0 %v205
    %290 = vmatmul.f32.gmra.mxu0 %v251
    %v291 = vpop.f32.mrf.mxu0
    %v292 = vadd.f32 %v212, %v291
    %293 = vmatmul.f32.gmra.mxu0 %v254
    %v294 = vpop.f32.mrf.mxu0
    %v295 = vadd.f32 %v217, %v294
    %296 = vmatmul.f32.gmra.mxu0 %v257
    %v297 = vpop.f32.mrf.mxu0
    %v298 = vadd.f32 %v222, %v297
    %299 = vmatmul.f32.gmra.mxu0 %v260
    %v300 = vpop.f32.mrf.mxu0
    %v301 = vadd.f32 %v227, %v300
    %302 = vmatmul.f32.gmra.mxu0 %v263
    %v303 = vpop.f32.mrf.mxu0
    %v304 = vadd.f32 %v232, %v303
    %305 = vmatmul.f32.gmra.mxu0 %v266
    %v306 = vpop.f32.mrf.mxu0
    %v307 = vadd.f32 %v237, %v306
    %308 = vmatmul.f32.gmra.mxu0 %v269
    %v309 = vpop.f32.mrf.mxu0
    %v310 = vadd.f32 %v242, %v309
    %311 = vmatmul.f32.gmra.mxu0 %v272
    %v312 = vpop.f32.mrf.mxu0
    %v313 = vadd.f32 %v247, %v312
    %314 = vdwg.mxu0
    %v315 = vmax.f32 %v292, 0.0
    %v316 = vmax.f32 %v295, 0.0
    %v317 = vmax.f32 %v298, 0.0
    %v318 = vmax.f32 %v301, 0.0
    %v319 = vmax.f32 %v304, 0.0
    %v320 = vmax.f32 %v307, 0.0
    %v321 = vmax.f32 %v310, 0.0
    %v322 = vmax.f32 %v313, 0.0
    %v323 = vld [vmem:[#allocation2] sm:$0xff]
    %v324 = vld [vmem:[#allocation2 + $0x8] sm:$0xff]
    %v325 = vld [vmem:[#allocation2 + $0x10] sm:$0xff]
    %v326 = vld [vmem:[#allocation2 + $0x18] sm:$0xff]
    %v327 = vld [vmem:[#allocation2 + $0x20] sm:$0xff]
    %v328 = vld [vmem:[#allocation2 + $0x28] sm:$0xff]
    %v329 = vld [vmem:[#allocation2 + $0x30] sm:$0xff]
    %v330 = vld [vmem:[#allocation2 + $0x38] sm:$0xff]
    %v331 = vmax.f32 %v323, %v315
    %v332 = vmax.f32 %v324, %v316
    %v333 = vmax.f32 %v325, %v317
    %v334 = vmax.f32 %v326, %v318
    %v335 = vmax.f32 %v327, %v319
    %v336 = vmax.f32 %v328, %v320
    %v337 = vmax.f32 %v329, %v321
    %v338 = vmax.f32 %v330, %v322
    %vm339 = vcmask 130048
    %340 = vst.msk [vmem:[#allocation2] sm:$0xff] %vm339, %v331
    %341 = vst.msk [vmem:[#allocation2 + $0x8] sm:$0xff] %vm339, %v332
    %342 = vst.msk [vmem:[#allocation2 + $0x10] sm:$0xff] %vm339, %v333
    %343 = vst.msk [vmem:[#allocation2 + $0x18] sm:$0xff] %vm339, %v334
    %344 = vst.msk [vmem:[#allocation2 + $0x20] sm:$0xff] %vm339, %v335
    %345 = vst.msk [vmem:[#allocation2 + $0x28] sm:$0xff] %vm339, %v336
    %346 = vst.msk [vmem:[#allocation2 + $0x30] sm:$0xff] %vm339, %v337
    %347 = vst.msk [vmem:[#allocation2 + $0x38] sm:$0xff] %vm339, %v338
    %s348 = scalar_lea.vmem %s0, 4
    %v349 = vld [vmem:[%s348] sm:$0xf]
    %v350 = vperm.slane %v349, 0
    %v351 = vmul.f32 %v84, %v350
    %v352 = vmul.f32 %v89, %v350
    %v353 = vmul.f32 %v94, %v350
    %v354 = vmul.f32 %v99, %v350
    %v355 = vperm.slane %v349, 1
    %v356 = vmul.f32 %v108, %v355
    %v357 = vmul.f32 %v112, %v355
    %v358 = vmul.f32 %v116, %v355
    %v359 = vmul.f32 %v120, %v355
    %v360 = vadd.f32 %v351, %v356
    %v361 = vadd.f32 %v352, %v357
    %v362 = vadd.f32 %v353, %v358
    %v363 = vadd.f32 %v354, %v359
    %v364 = vperm.slane %v349, 2
    %v365 = vmul.f32 %v133, %v364
    %v366 = vmul.f32 %v137, %v364
    %v367 = vmul.f32 %v141, %v364
    %v368 = vmul.f32 %v145, %v364
    %v369 = vadd.f32 %v360, %v365
    %v370 = vadd.f32 %v361, %v366
    %v371 = vadd.f32 %v362, %v367
    %v372 = vadd.f32 %v363, %v368
    %v373 = vperm.slane %v349, 3
    %v374 = vmul.f32 %v158, %v373
    %v375 = vmul.f32 %v162, %v373
    %v376 = vmul.f32 %v166, %v373
    %v377 = vmul.f32 %v170, %v373
    %v378 = vadd.f32 %v369, %v374
    %v379 = vadd.f32 %v370, %v375
    %v380 = vadd.f32 %v371, %v376
    %v381 = vadd.f32 %v372, %v377
    %v382 = vadd.f32 %v378, %v184
    %v383 = vadd.f32 %v379, %v189
    %v384 = vadd.f32 %v380, %v194
    %v385 = vadd.f32 %v381, %v199
    %v386 = vmax.f32 %v382, 0.0
    %v387 = vmax.f32 %v383, 0.0
    %v388 = vmax.f32 %v384, 0.0
    %v389 = vmax.f32 %v385, 0.0
    %390 = vmatpush.msra.mxu0 0.0
    %391 = vmatpush.msra.mxu0 0.0
    %392 = vmatpush.msra.mxu0 0.0
    %393 = vmatpush.msra.mxu0 0.0
    %394 = vmatpush.msra.mxu0 0.0
    %395 = vmatpush.msra.mxu0 0.0
    %396 = vmatpush.msra.mxu0 0.0
    %397 = vmatpush.msra.mxu0 0.0
    %398 = vmatpush.msra.mxu0 0.0
    %399 = vmatpush.msra.mxu0 0.0
    %400 = vmatpush.msra.mxu0 0.0
    %401 = vmatpush.msra.mxu0 0.0
    %402 = vmatpush.msra.mxu0 %v389
    %403 = vmatpush.msra.mxu0 %v388
    %404 = vmatpush.msra.mxu0 %v387
    %405 = vmatpush.msra.mxu0 %v386
    %406 = vmatmul.f32.gmra.mxu0 %v251
    %v407 = vpop.f32.mrf.mxu0
    %v408 = vadd.f32 %v212, %v407
    %409 = vmatmul.f32.gmra.mxu0 %v254
    %v410 = vpop.f32.mrf.mxu0
    %v411 = vadd.f32 %v217, %v410
    %412 = vmatmul.f32.gmra.mxu0 %v257
    %v413 = vpop.f32.mrf.mxu0
    %v414 = vadd.f32 %v222, %v413
    %415 = vmatmul.f32.gmra.mxu0 %v260
    %v416 = vpop.f32.mrf.mxu0
    %v417 = vadd.f32 %v227, %v416
    %418 = vmatmul.f32.gmra.mxu0 %v263
    %v419 = vpop.f32.mrf.mxu0
    %v420 = vadd.f32 %v232, %v419
    %421 = vmatmul.f32.gmra.mxu0 %v266
    %v422 = vpop.f32.mrf.mxu0
    %v423 = vadd.f32 %v237, %v422
    %424 = vmatmul.f32.gmra.mxu0 %v269
    %v425 = vpop.f32.mrf.mxu0
    %v426 = vadd.f32 %v242, %v425
    %427 = vmatmul.f32.gmra.mxu0 %v272
    %v428 = vpop.f32.mrf.mxu0
    %v429 = vadd.f32 %v247, %v428
    %430 = vdwg.mxu0
    %v431 = vmax.f32 %v408, 0.0
    %v432 = vmax.f32 %v411, 0.0
    %v433 = vmax.f32 %v414, 0.0
    %v434 = vmax.f32 %v417, 0.0
    %v435 = vmax.f32 %v420, 0.0
    %v436 = vmax.f32 %v423, 0.0
    %v437 = vmax.f32 %v426, 0.0
    %v438 = vmax.f32 %v429, 0.0
    %s439 = scalar_lea.vmem [#allocation2], 64
    %v440 = vld [vmem:[%s439] sm:$0xff]
    %v441 = vld [vmem:[%s439 + $0x8] sm:$0xff]
    %v442 = vld [vmem:[%s439 + $0x10] sm:$0xff]
    %v443 = vld [vmem:[%s439 + $0x18] sm:$0xff]
    %v444 = vld [vmem:[%s439 + $0x20] sm:$0xff]
    %v445 = vld [vmem:[%s439 + $0x28] sm:$0xff]
    %v446 = vld [vmem:[%s439 + $0x30] sm:$0xff]
    %v447 = vld [vmem:[%s439 + $0x38] sm:$0xff]
    %v448 = vmax.f32 %v440, %v431
    %v449 = vmax.f32 %v441, %v432
    %v450 = vmax.f32 %v442, %v433
    %v451 = vmax.f32 %v443, %v434
    %v452 = vmax.f32 %v444, %v435
    %v453 = vmax.f32 %v445, %v436
    %v454 = vmax.f32 %v446, %v437
    %v455 = vmax.f32 %v447, %v438
    %456 = vst.msk [vmem:[%s439] sm:$0xff] %vm339, %v448
    %457 = vst.msk [vmem:[%s439 + $0x8] sm:$0xff] %vm339, %v449
    %458 = vst.msk [vmem:[%s439 + $0x10] sm:$0xff] %vm339, %v450
    %459 = vst.msk [vmem:[%s439 + $0x18] sm:$0xff] %vm339, %v451
    %460 = vst.msk [vmem:[%s439 + $0x20] sm:$0xff] %vm339, %v452
    %461 = vst.msk [vmem:[%s439 + $0x28] sm:$0xff] %vm339, %v453
    %462 = vst.msk [vmem:[%s439 + $0x30] sm:$0xff] %vm339, %v454
    %463 = vst.msk [vmem:[%s439 + $0x38] sm:$0xff] %vm339, %v455
    // Predicated region
    $region42: #{tnet_forward.1} parent=1 // pred_check
      %p464 = pneg %p35
    $region43: #{tnet_forward.1} parent=1 // pred_check_branch
      %466 = sbr.rel (%p464) target = $region45
    $region44: #{tnet_forward.1} parent=1 // pred_region
      %v467 = vld [vmem:[%s5] sm:$0xff]
      %v468 = vld [vmem:[%s5 + $0x8] sm:$0xff]
      %v469 = vld [vmem:[%s5 + $0x10] sm:$0xff]
      %v470 = vld [vmem:[%s5 + $0x18] sm:$0xff]
      %v471 = vld [vmem:[%s6] sm:$0xff]
      %v472 = vld [vmem:[%s6 + $0x8] sm:$0xff]
      %v473 = vld [vmem:[%s6 + $0x10] sm:$0xff]
      %v474 = vld [vmem:[%s6 + $0x18] sm:$0xff]
      %v475 = vld [vmem:[%s7] sm:$0xff]
      %v476 = vld [vmem:[%s7 + $0x8] sm:$0x1]
      %v477 = vld [vmem:[%s8] sm:$0xff]
      %v478 = vld [vmem:[%s8 + $0x8] sm:$0x1]
      %v479 = vld [vmem:[#allocation2] sm:$0xff]
      %v480 = vld [vmem:[#allocation2 + $0x8] sm:$0xff]
      %v481 = vld [vmem:[#allocation2 + $0x10] sm:$0xff]
      %v482 = vld [vmem:[#allocation2 + $0x18] sm:$0xff]
      %v483 = vld [vmem:[#allocation2 + $0x20] sm:$0xff]
      %v484 = vld [vmem:[#allocation2 + $0x28] sm:$0xff]
      %v485 = vld [vmem:[#allocation2 + $0x30] sm:$0xff]
      %v486 = vld [vmem:[#allocation2 + $0x38] sm:$0xff]
      %v487 = vsel %vm339, %v479, -inf
      %488 = vmax.xlane.f32.xlu0 %v487
      %v489 = vpop.xlane.xlu0 %488
      %v490 = vsel %vm339, %v480, -inf
      %491 = vmax.xlane.f32.xlu0 %v490
      %v492 = vpop.xlane.xlu0 %491
      %v493 = vsel %vm339, %v481, -inf
      %494 = vmax.xlane.f32.xlu0 %v493
      %v495 = vpop.xlane.xlu0 %494
      %v496 = vsel %vm339, %v482, -inf
      %497 = vmax.xlane.f32.xlu0 %v496
      %v498 = vpop.xlane.xlu0 %497
      %v499 = vsel %vm339, %v483, -inf
      %500 = vmax.xlane.f32.xlu0 %v499
      %v501 = vpop.xlane.xlu0 %500
      %v502 = vsel %vm339, %v484, -inf
      %503 = vmax.xlane.f32.xlu0 %v502
      %v504 = vpop.xlane.xlu0 %503
      %v505 = vsel %vm339, %v485, -inf
      %506 = vmax.xlane.f32.xlu0 %v505
      %v507 = vpop.xlane.xlu0 %506
      %v508 = vsel %vm339, %v486, -inf
      %509 = vmax.xlane.f32.xlu0 %v508
      %v510 = vpop.xlane.xlu0 %509
      %vm511 = vcmask 523264
      %v513 = vsel %vm511, %v467, 0
      %v516 = vsel %vm511, %v468, 0
      %v519 = vsel %vm511, %v469, 0
      %v522 = vsel %vm511, %v470, 0
      %524 = vmatpush.msra.mxu0 0.0
      %525 = vmatpush.msra.mxu0 0.0
      %526 = vmatpush.msra.mxu0 0.0
      %527 = vmatpush.msra.mxu0 0.0
      %528 = vmatpush.msra.mxu0 0.0
      %529 = vmatpush.msra.mxu0 0.0
      %530 = vmatpush.msra.mxu0 0.0
      %531 = vmatpush.msra.mxu0 0.0
      %532 = vmatpush.msra.mxu0 %v510
      %533 = vmatpush.msra.mxu0 %v507
      %534 = vmatpush.msra.mxu0 %v504
      %535 = vmatpush.msra.mxu0 %v501
      %536 = vmatpush.msra.mxu0 %v498
      %537 = vmatpush.msra.mxu0 %v495
      %538 = vmatpush.msra.mxu0 %v492
      %539 = vmatpush.msra.mxu0 %v489
      %540 = vmatmul.f32.gmra.mxu0 %v513
      %v541 = vpop.f32.mrf.mxu0
      %v542 = vadd.f32 %v471, %v541
      %543 = vmatmul.f32.gmra.mxu0 %v516
      %v544 = vpop.f32.mrf.mxu0
      %v545 = vadd.f32 %v472, %v544
      %546 = vmatmul.f32.gmra.mxu0 %v519
      %v547 = vpop.f32.mrf.mxu0
      %v548 = vadd.f32 %v473, %v547
      %549 = vmatmul.f32.gmra.mxu0 %v522
      %v550 = vpop.f32.mrf.mxu0
      %v551 = vadd.f32 %v474, %v550
      %552 = vdwg.mxu0
      %v553 = vmax.f32 %v542, 0.0
      %v554 = vmax.f32 %v545, 0.0
      %v555 = vmax.f32 %v548, 0.0
      %v556 = vmax.f32 %v551, 0.0
      %v558 = vsel %vm249, %v475, 0
      %v561 = vsel %vm249, %v476, 0
      %563 = vmatpush.msra.mxu0 0.0
      %564 = vmatpush.msra.mxu0 0.0
      %565 = vmatpush.msra.mxu0 0.0
      %566 = vmatpush.msra.mxu0 0.0
      %567 = vmatpush.msra.mxu0 0.0
      %568 = vmatpush.msra.mxu0 0.0
      %569 = vmatpush.msra.mxu0 0.0
      %570 = vmatpush.msra.mxu0 0.0
      %571 = vmatpush.msra.mxu0 0.0
      %572 = vmatpush.msra.mxu0 0.0
      %573 = vmatpush.msra.mxu0 0.0
      %574 = vmatpush.msra.mxu0 0.0
      %575 = vmatpush.msra.mxu0 %v556
      %576 = vmatpush.msra.mxu0 %v555
      %577 = vmatpush.msra.mxu0 %v554
      %578 = vmatpush.msra.mxu0 %v553
      %579 = vmatmul.f32.gmra.mxu0 %v558
      %v580 = vpop.f32.mrf.mxu0
      %v581 = vadd.f32 %v477, %v580
      %582 = vmatmul.f32.gmra.mxu0 %v561
      %v583 = vpop.f32.mrf.mxu0
      %v584 = vadd.f32 %v478, %v583
      %585 = vdwg.mxu0
      %vm586 = vcmask 7168
      %587 = vst.msk [vmem:[%s9] sm:$0xff] %vm586, %v581
      %vm588 = vcmask 0
      %589 = vst.msk [vmem:[%s9 + $0x8] sm:$0x1] %vm588, %v584
      %v590 = vld [vmem:[%s0] sm:$0xf]
      %592 = vset.pattern.permute.xlu0 0
      %593 = vperm.xlu0 %592, %v581
      %v594 = vpop.permute.xlu0 %593
      %v596 = vmul.f32 %v594, %v590
      %v598 = vrot.slane %v596, 1
      %v600 = vadd.f32 %v596, %v598
      %v601 = vrot.slane %v596, 2
      %v603 = vadd.f32 %v600, %v601
      %v605 = vrot.slane %v590, 5
      %v607 = vmul.f32 %v594, %v605
      %v609 = vrot.slane %v607, 1
      %v611 = vadd.f32 %v607, %v609
      %v612 = vrot.slane %v607, 2
      %v614 = vadd.f32 %v611, %v612
      %v615 = vrot.slane %v590, 2
      %v617 = vmul.f32 %v594, %v615
      %v619 = vrot.slane %v617, 1
      %v621 = vadd.f32 %v617, %v619
      %623 = vset.pattern.permute.xlu0 0
      %624 = vperm.xlu0 %623, %v584
      %v625 = vpop.permute.xlu0 %624
      %v627 = vmul.f32 %v625, %v615
      %v629 = vrot.slane %v627, 2
      %v631 = vadd.f32 %v621, %v629
      %v633 = vrot.slane %v614, 2
      %v636 = vrot.slane %v631, 4
      %vm638 = vcmask 1040384
      %v639 = vsel %vm638, %v603, %v633
      %vm640 = vcmask 1041408
      %v641 = vsel %vm640, %v639, %v636
      %vm642 = vcmask 1042432
      %v643 = vsel %vm642, %v641, %v590
      %vm644 = vcmask 125952
      %645 = vst.msk [vmem:[#allocation3] sm:$0xf] %vm644, %v643
      %v646 = vld [vmem:[%s439] sm:$0xff]
      %v647 = vld [vmem:[%s439 + $0x8] sm:$0xff]
      %v648 = vld [vmem:[%s439 + $0x10] sm:$0xff]
      %v649 = vld [vmem:[%s439 + $0x18] sm:$0xff]
      %v650 = vld [vmem:[%s439 + $0x20] sm:$0xff]
      %v651 = vld [vmem:[%s439 + $0x28] sm:$0xff]
      %v652 = vld [vmem:[%s439 + $0x30] sm:$0xff]
      %v653 = vld [vmem:[%s439 + $0x38] sm:$0xff]
      %v654 = vsel %vm339, %v646, -inf
      %655 = vmax.xlane.f32.xlu0 %v654
      %v656 = vpop.xlane.xlu0 %655
      %v657 = vsel %vm339, %v647, -inf
      %658 = vmax.xlane.f32.xlu0 %v657
      %v659 = vpop.xlane.xlu0 %658
      %v660 = vsel %vm339, %v648, -inf
      %661 = vmax.xlane.f32.xlu0 %v660
      %v662 = vpop.xlane.xlu0 %661
      %v663 = vsel %vm339, %v649, -inf
      %664 = vmax.xlane.f32.xlu0 %v663
      %v665 = vpop.xlane.xlu0 %664
      %v666 = vsel %vm339, %v650, -inf
      %667 = vmax.xlane.f32.xlu0 %v666
      %v668 = vpop.xlane.xlu0 %667
      %v669 = vsel %vm339, %v651, -inf
      %670 = vmax.xlane.f32.xlu0 %v669
      %v671 = vpop.xlane.xlu0 %670
      %v672 = vsel %vm339, %v652, -inf
      %673 = vmax.xlane.f32.xlu0 %v672
      %v674 = vpop.xlane.xlu0 %673
      %v675 = vsel %vm339, %v653, -inf
      %676 = vmax.xlane.f32.xlu0 %v675
      %v677 = vpop.xlane.xlu0 %676
      %678 = vmatpush.msra.mxu0 0.0
      %679 = vmatpush.msra.mxu0 0.0
      %680 = vmatpush.msra.mxu0 0.0
      %681 = vmatpush.msra.mxu0 0.0
      %682 = vmatpush.msra.mxu0 0.0
      %683 = vmatpush.msra.mxu0 0.0
      %684 = vmatpush.msra.mxu0 0.0
      %685 = vmatpush.msra.mxu0 0.0
      %686 = vmatpush.msra.mxu0 %v677
      %687 = vmatpush.msra.mxu0 %v674
      %688 = vmatpush.msra.mxu0 %v671
      %689 = vmatpush.msra.mxu0 %v668
      %690 = vmatpush.msra.mxu0 %v665
      %691 = vmatpush.msra.mxu0 %v662
      %692 = vmatpush.msra.mxu0 %v659
      %693 = vmatpush.msra.mxu0 %v656
      %694 = vmatmul.f32.gmra.mxu0 %v513
      %v695 = vpop.f32.mrf.mxu0
      %v696 = vadd.f32 %v471, %v695
      %697 = vmatmul.f32.gmra.mxu0 %v516
      %v698 = vpop.f32.mrf.mxu0
      %v699 = vadd.f32 %v472, %v698
      %700 = vmatmul.f32.gmra.mxu0 %v519
      %v701 = vpop.f32.mrf.mxu0
      %v702 = vadd.f32 %v473, %v701
      %703 = vmatmul.f32.gmra.mxu0 %v522
      %v704 = vpop.f32.mrf.mxu0
      %v705 = vadd.f32 %v474, %v704
      %706 = vdwg.mxu0
      %v707 = vmax.f32 %v696, 0.0
      %v708 = vmax.f32 %v699, 0.0
      %v709 = vmax.f32 %v702, 0.0
      %v710 = vmax.f32 %v705, 0.0
      %711 = vmatpush.msra.mxu0 0.0
      %712 = vmatpush.msra.mxu0 0.0
      %713 = vmatpush.msra.mxu0 0.0
      %714 = vmatpush.msra.mxu0 0.0
      %715 = vmatpush.msra.mxu0 0.0
      %716 = vmatpush.msra.mxu0 0.0
      %717 = vmatpush.msra.mxu0 0.0
      %718 = vmatpush.msra.mxu0 0.0
      %719 = vmatpush.msra.mxu0 0.0
      %720 = vmatpush.msra.mxu0 0.0
      %721 = vmatpush.msra.mxu0 0.0
      %722 = vmatpush.msra.mxu0 0.0
      %723 = vmatpush.msra.mxu0 %v710
      %724 = vmatpush.msra.mxu0 %v709
      %725 = vmatpush.msra.mxu0 %v708
      %726 = vmatpush.msra.mxu0 %v707
      %727 = vmatmul.f32.gmra.mxu0 %v558
      %v728 = vpop.f32.mrf.mxu0
      %v729 = vadd.f32 %v477, %v728
      %730 = vmatmul.f32.gmra.mxu0 %v561
      %v731 = vpop.f32.mrf.mxu0
      %v732 = vadd.f32 %v478, %v731
      %733 = vdwg.mxu0
      %s734 = scalar_lea.vmem %s9, 16
      %735 = vst.msk [vmem:[%s734] sm:$0xff] %vm586, %v729
      %736 = vst.msk [vmem:[%s734 + $0x8] sm:$0x1] %vm588, %v732
      %v737 = vld [vmem:[%s348] sm:$0xf]
      %739 = vset.pattern.permute.xlu0 0
      %740 = vperm.xlu0 %739, %v729
      %v741 = vpop.permute.xlu0 %740
      %v743 = vmul.f32 %v741, %v737
      %v745 = vrot.slane %v743, 1
      %v747 = vadd.f32 %v743, %v745
      %v748 = vrot.slane %v743, 2
      %v750 = vadd.f32 %v747, %v748
      %v752 = vrot.slane %v737, 5
      %v754 = vmul.f32 %v741, %v752
      %v756 = vrot.slane %v754, 1
      %v758 = vadd.f32 %v754, %v756
      %v759 = vrot.slane %v754, 2
      %v761 = vadd.f32 %v758, %v759
      %v762 = vrot.slane %v737, 2
      %v764 = vmul.f32 %v741, %v762
      %v766 = vrot.slane %v764, 1
      %v768 = vadd.f32 %v764, %v766
      %770 = vset.pattern.permute.xlu0 0
      %771 = vperm.xlu0 %770, %v732
      %v772 = vpop.permute.xlu0 %771
      %v774 = vmul.f32 %v772, %v762
      %v776 = vrot.slane %v774, 2
      %v778 = vadd.f32 %v768, %v776
      %v780 = vrot.slane %v761, 2
      %v783 = vrot.slane %v778, 4
      %v785 = vsel %vm638, %v750, %v780
      %v786 = vsel %vm640, %v785, %v783
      %v787 = vsel %vm642, %v786, %v737
      %s788 = scalar_lea.vmem [#allocation3], 4
      %789 = vst.msk [vmem:[%s788] sm:$0xf] %vm644, %v787
    $region45: #{tnet_forward.1} parent=1 // pred_fallthru
      _
    // Predicated region
    $region46: #{tnet_forward.1} parent=1 // pred_check
      _
    $region47: #{tnet_forward.1} parent=1 // pred_check_branch
      %791 = sbr.rel (0) target = $region49
    $region48: #{tnet_forward.1} parent=1 // pred_region
      _
    $region49: #{tnet_forward.1} parent=1 // pred_fallthru
      _
    // Predicated region
    $region50: #{tnet_forward.1} parent=1 // pred_check
      _
    $region51: #{tnet_forward.1} parent=1 // pred_check_branch
      %793 = sbr.rel (0) target = $region53
    $region52: #{tnet_forward.1} parent=1 // pred_region
      %795 = vsyncadd [#allocation4], 0
      %s796 = sshll.u32 [#allocation3], 4
      %s797 = int_to_ptr.vmem [resolvable:$true] %s796
      %s798 = sshll.u32 %s10, 4
      %s799 = int_to_ptr.hbm [resolvable:$true] %s798
      %804 = dma.vmem_to_hbm [thread:$0]  %s797, 128, %s799, [#allocation4], 64, 64, 4
    $region53: #{tnet_forward.1} parent=1 // pred_fallthru
      _
    // Predicated region
    $region54: #{tnet_forward.1} parent=1 // pred_check
      _
    $region55: #{tnet_forward.1} parent=1 // pred_check_branch
      %806 = sbr.rel (0) target = $region57
    $region56: #{tnet_forward.1} parent=1 // pred_region
      _
    $region57: #{tnet_forward.1} parent=1 // pred_fallthru
      _
    // Predicated region
    $region58: #{tnet_forward.1} parent=1 // pred_check
      _
    $region59: #{tnet_forward.1} parent=1 // pred_check_branch
      %808 = sbr.rel (0) target = $region61
    $region60: #{tnet_forward.1} parent=1 // pred_region
      %810 = dma.done [#allocation4], 128
    $region61: #{tnet_forward.1} parent=1 // pred_fallthru
      _
    %811 = vsyncpa [#allocation4], 1

</llo_original>
